<compile_context>
chip_gen: v6e
topology: v6e:2x2x1
jax: 0.10.0
libtpu: 0.0.40
codegen_flags: <defaults>
</compile_context>

<pallas_src>
import jax
import jax.numpy as jnp
from jax.experimental import pallas as pl
from jax.experimental.pallas import tpu as pltpu


# ----------------------------------------------------------------------------
# Fused TCN kernel (Bb batch elements per grid step, all layers fused)
# ----------------------------------------------------------------------------
def _make_tcn_kernel(Bb, T, ksize, layer_cfgs, P, C_max, c_in0, c_out_pad):
  """layer_cfgs: list of (c_in, c_out, dilation, has_downsample)."""
  n_layers = len(layer_cfgs)
  c_last = layer_cfgs[-1][1]

  def kernel(*refs):
    # --- unpack refs: x, per-layer weights, output, two VMEM scratch bufs ---
    idx = 0
    x_ref = refs[idx]; idx += 1
    per_layer = []
    for (_, _, _, has_ds) in layer_cfgs:
      n = 6 if has_ds else 4
      per_layer.append(refs[idx:idx + n]); idx += n
    o_ref = refs[idx]; idx += 1
    buf_in = refs[idx]; idx += 1      # (Bb, P+T, C_max) f32: layer input
    buf_mid = refs[idx]; idx += 1     # (Bb, P+T, C_max) f32: conv1 output

    # Zero the causal-padding rows once per grid step; they are never written
    # again, so every layer's shifted reads see correct zeros.  (P is tiny
    # here; a program_id==0 guard would be UNSAFE under v7x megacore sharding.)
    if P > 0:
      zpad = jnp.zeros((Bb, P, C_max), jnp.float32)
      buf_in[:, 0:P, :] = zpad
      buf_mid[:, 0:P, :] = zpad

    # Load this step's batch slab into the padded buffer.
    buf_in[:, P:P + T, 0:c_in0] = x_ref[...].astype(jnp.float32)

    def causal_conv(buf, c_in, w_ref, b_ref, dil):
      # Matmul operands in bf16 (MXU-native), f32 accumulation, f32 bias.
      w = w_ref[...]                                   # (k*c_in, c_out) bf16
      if c_in % 128 == 0:
        # Wide-channel path: k accumulated dots, no lane-axis concat copies.
        y = None
        for j in range(ksize):
          s = (ksize - 1 - j) * dil
          xs = buf[:, P - s:P - s + T, 0:c_in].reshape(Bb * T, c_in)
          d = jnp.dot(xs.astype(jnp.bfloat16), w[j * c_in:(j + 1) * c_in, :],
                      preferred_element_type=jnp.float32)
          y = d if y is None else y + d
      else:
        # Narrow-channel path: channel-stack the k causally-shifted views
        # (static slices of the padded scratch), then ONE matmul with the
        # batch folded into the M dimension.
        parts = []
        for j in range(ksize):
          s = (ksize - 1 - j) * dil
          parts.append(
              buf[:, P - s:P - s + T, 0:c_in]
              .reshape(Bb * T, c_in).astype(jnp.bfloat16))
        xk = parts[0] if ksize == 1 else jnp.concatenate(parts, axis=1)
        y = jnp.dot(xk, w, preferred_element_type=jnp.float32)
      return y + b_ref[...]                            # f32 bias, broadcast

    for li, (c_in, c_out, dil, has_ds) in enumerate(layer_cfgs):
      if has_ds:
        w1, b1, w2, b2, wd, bd = per_layer[li]
      else:
        w1, b1, w2, b2 = per_layer[li]

      h = jnp.maximum(causal_conv(buf_in, c_in, w1, b1, dil), 0.0)  # conv1+relu
      buf_mid[:, P:P + T, 0:c_out] = h.reshape(Bb, T, c_out)        # dropout=id
      g = jnp.maximum(causal_conv(buf_mid, c_out, w2, b2, dil), 0.0)  # conv2+relu

      # Residual read (and downsample dot) deferred until needed -> the
      # (Bb*T, c_in) tile is not live across the two conv matmuls.
      x_res = buf_in[:, P:P + T, 0:c_in].reshape(Bb * T, c_in)
      if has_ds:
        res = jnp.dot(x_res.astype(jnp.bfloat16), wd[...],
                      preferred_element_type=jnp.float32) + bd[...]
      else:
        res = x_res
      out = jnp.maximum(g + res, 0.0)                  # residual add + relu, f32

      if li == n_layers - 1:
        # Lane-dense epilogue: pad the channel axis to a multiple of 128 so
        # the final stores are unmasked; the wrapper slices the pad off.
        if c_out_pad != c_last:
          out = jnp.concatenate(
              [out, jnp.zeros((Bb * T, c_out_pad - c_last), jnp.float32)],
              axis=1)
        o_ref[...] = out.reshape(Bb, T, c_out_pad).astype(o_ref.dtype)
      else:
        buf_in[:, P:P + T, 0:c_out] = out.reshape(Bb, T, c_out)  # next input

  return kernel


def temporal_conv_net_pallas(x, params, ksize, batch_block=None):
  """Full TemporalConvNet forward: [B, T, num_inputs] -> [B, T, C_last]."""
  B, T, c_in0 = x.shape
  if batch_block is None:
    batch_block = B           # whole batch per step (min grid overhead, max M)
  assert B % batch_block == 0
  Bb = batch_block

  layer_cfgs = []
  args = [x]
  in_specs = [pl.BlockSpec((Bb, T, c_in0), lambda b: (b, 0, 0))]

  def _const_spec(a):
    # Whole-array block, constant index map -> fetched once, never re-DMA'd.
    return pl.BlockSpec(a.shape, lambda b, _n=a.ndim: (0,) * _n)

  weight_bytes = 0
  c_prev = c_in0
  for i, lp in enumerate(params):
    c_out = lp["b1"].shape[1]
    dil = 2 ** i
    has_ds = "wd" in lp
    layer_cfgs.append((c_prev, c_out, dil, has_ds))
    # Weights go in as bf16 (MXU operands); biases stay f32.
    layer_args = [lp["w1"].astype(jnp.bfloat16), lp["b1"],
                  lp["w2"].astype(jnp.bfloat16), lp["b2"]]
    if has_ds:
      layer_args += [lp["wd"].astype(jnp.bfloat16), lp["bd"]]
    for a in layer_args:
      args.append(a)
      in_specs.append(_const_spec(a))
      weight_bytes += int(a.size) * a.dtype.itemsize
    c_prev = c_out
  c_last = c_prev

  P = max((ksize - 1) * (2 ** i) for i in range(len(params)))
  C_max = max([c_in0] + [cfg[1] for cfg in layer_cfgs])
  c_out_pad = c_last if c_last % 128 == 0 else ((c_last + 127) // 128) * 128

  kernel = _make_tcn_kernel(Bb, T, ksize, layer_cfgs, P, C_max, c_in0,
                            c_out_pad)

  # --- explicit VMEM budget: weights double-buffered by the pipeline, two f32
  # activation scratch buffers, double-buffered x/o blocks, plus headroom.
  scratch_bytes = 2 * Bb * (P + T) * C_max * 4
  io_bytes = 2 * (Bb * T * c_in0 + Bb * T * c_out_pad) * x.dtype.itemsize
  needed = 2 * weight_bytes + scratch_bytes + io_bytes
  vmem_limit = int(min(110 << 20, max(2 * needed + (4 << 20), 16 << 20)))

  # --- scheduling hint for XLA around the fused custom call
  flops = 0
  for (c_in, c_out, _, has_ds) in layer_cfgs:
    flops += 2 * B * T * (ksize * c_in * c_out + ksize * c_out * c_out)
    if has_ds:
      flops += 2 * B * T * c_in * c_out
  bytes_accessed = (weight_bytes + int(x.size) * x.dtype.itemsize
                    + B * T * c_out_pad * x.dtype.itemsize)

  out_padded = pl.pallas_call(
      kernel,
      out_shape=jax.ShapeDtypeStruct((B, T, c_out_pad), x.dtype),
      grid_spec=pltpu.PrefetchScalarGridSpec(
          num_scalar_prefetch=0,
          grid=(B // Bb,),
          in_specs=in_specs,
          out_specs=pl.BlockSpec((Bb, T, c_out_pad), lambda b: (b, 0, 0)),
          scratch_shapes=[
              pltpu.VMEM((Bb, P + T, C_max), jnp.float32),  # layer input
              pltpu.VMEM((Bb, P + T, C_max), jnp.float32),  # conv1 output
          ],
      ),
      compiler_params=pltpu.CompilerParams(
          dimension_semantics=("parallel",),
          vmem_limit_bytes=vmem_limit),
      cost_estimate=pl.CostEstimate(
          flops=int(flops), transcendentals=0,
          bytes_accessed=int(bytes_accessed)),
  )(*args)

  if c_out_pad != c_last:
    return out_padded[:, :, :c_last]
  return out_padded


# ----------------------------------------------------------------------------
# Parameter construction (deterministic, synthetic) + weight-norm glue
# ----------------------------------------------------------------------------
def _weight_norm_effective(v, g):
  # v: (c_out, c_in, k), g: (c_out,)  ->  W = g * v / ||v||  (norm over (in,k))
  norm = jnp.sqrt(jnp.sum(v * v, axis=(1, 2), keepdims=True))
  return (g[:, None, None] / norm) * v


def make_params(key, num_inputs, num_channels, ksize):
  """Conv weights stored kernel-ready as (k*c_in, c_out): the transpose of
  PyTorch's (c_out, c_in, k) reshaped so rows [j*c_in:(j+1)*c_in] hold tap j."""
  params = []
  for i, c_out in enumerate(num_channels):
    c_in = num_inputs if i == 0 else num_channels[i - 1]
    keys = jax.random.split(jax.random.fold_in(key, i), 8)

    v1 = 0.01 * jax.random.normal(keys[0], (c_out, c_in, ksize), jnp.float32)
    g1 = 1.0 + 0.1 * jax.random.normal(keys[1], (c_out,), jnp.float32)
    w1_eff = _weight_norm_effective(v1, g1)                  # (c_out, c_in, k)
    b1 = 0.1 * jax.random.normal(keys[2], (c_out,), jnp.float32)

    v2 = 0.01 * jax.random.normal(keys[3], (c_out, c_out, ksize), jnp.float32)
    g2 = 1.0 + 0.1 * jax.random.normal(keys[4], (c_out,), jnp.float32)
    w2_eff = _weight_norm_effective(v2, g2)
    b2 = 0.1 * jax.random.normal(keys[5], (c_out,), jnp.float32)

    lp = {
        "w1": jnp.transpose(w1_eff, (2, 1, 0)).reshape(ksize * c_in, c_out),
        "b1": b1[None, :],                                     # (1, c_out)
        "w2": jnp.transpose(w2_eff, (2, 1, 0)).reshape(ksize * c_out, c_out),
        "b2": b2[None, :],
        # PyTorch-layout copies for the reference check
        "_w1_oik": w1_eff, "_w2_oik": w2_eff,
    }
    if c_in != c_out:
      wd = 0.01 * jax.random.normal(keys[6], (c_out, c_in, 1), jnp.float32)
      bd = 0.1 * jax.random.normal(keys[7], (c_out,), jnp.float32)
      lp["wd"] = jnp.transpose(wd[:, :, 0], (1, 0))            # (c_in, c_out)
      lp["bd"] = bd[None, :]
      lp["_wd_oik"] = wd
    params.append(lp)
  return params


# ----------------------------------------------------------------------------
# Pure-JAX reference (mirrors the PyTorch forward, inference mode).
# matmul_dtype=bf16 mirrors the kernel's MXU precision (bf16 operands, f32
# accumulation); matmul_dtype=f32 is the exact PyTorch-f32 semantics.
# ----------------------------------------------------------------------------
def _causal_conv_ref(x, w_oik, b, dilation, matmul_dtype):
  # x: (B, T, c_in), w_oik: (c_out, c_in, k)
  k = w_oik.shape[2]
  T = x.shape[1]
  xb = x.astype(matmul_dtype)
  wb = w_oik.astype(matmul_dtype)
  y = jnp.zeros((x.shape[0], T, w_oik.shape[0]), jnp.float32)
  for j in range(k):
    shift = (k - 1 - j) * dilation
    xs = jnp.pad(xb, ((0, 0), (shift, 0), (0, 0)))[:, :T, :]
    y = y + jnp.einsum("btc,oc->bto", xs, wb[:, :, j],
                       preferred_element_type=jnp.float32)
  return y + b[None, None, :]


def temporal_conv_net_ref(x, params, ksize, matmul_dtype=jnp.bfloat16):
  del ksize  # inferred from weight shapes
  out = x.astype(jnp.float32)
  for i, lp in enumerate(params):
    d = 2 ** i
    h = jax.nn.relu(_causal_conv_ref(out, lp["_w1_oik"], lp["b1"][0], d,
                                     matmul_dtype))
    g = jax.nn.relu(_causal_conv_ref(h, lp["_w2_oik"], lp["b2"][0], d,
                                     matmul_dtype))
    if "_wd_oik" in lp:
      res = jnp.einsum("btc,oc->bto", out.astype(matmul_dtype),
                       lp["_wd_oik"][:, :, 0].astype(matmul_dtype),
                       preferred_element_type=jnp.float32) + lp["bd"]
    else:
      res = out
    out = jax.nn.relu(g + res)
  return out


# ----------------------------------------------------------------------------
if __name__ == "__main__":
  # TemporalConvNet(num_inputs=4, num_channels=[8, 16], kernel_size=2)
  B, T, num_inputs = 2, 16, 4
  num_channels = [8, 16]
  ksize = 2

  key = jax.random.PRNGKey(0)
  kx, kp = jax.random.split(key)
  x = jax.random.normal(kx, (B, T, num_inputs), jnp.float32)  # [B, seq, feat]
  params = make_params(kp, num_inputs, num_channels, ksize)

  out = temporal_conv_net_pallas(x, params, ksize)
  out = jax.block_until_ready(out)
  assert out.shape == (B, T, num_channels[-1]), out.shape

  # Tight check vs a reference with the same matmul precision (bf16 operands,
  # f32 accumulation) ...
  ref_bf = temporal_conv_net_ref(x, params, ksize, matmul_dtype=jnp.bfloat16)
  assert jnp.allclose(out, ref_bf, rtol=1e-4, atol=1e-5), (
      float(jnp.max(jnp.abs(out - ref_bf))))
  # ... and a looser check vs the exact f32 (PyTorch) semantics.
  ref_f32 = temporal_conv_net_ref(x, params, ksize, matmul_dtype=jnp.float32)
  assert jnp.allclose(out, ref_f32, rtol=5e-2, atol=5e-3), (
      float(jnp.max(jnp.abs(out - ref_f32))))

  # TODO(synk): dropout layers are identity here (inference semantics); no
  # stochastic training-mode dropout is implemented.
  print("KERNEL_OK")
</pallas_src>

<mosaic_0001>
module attributes {stable_mosaic.version = 11 : i64} {
  func.func @kernel(%arg0: i32, %arg1: memref<2x16x4xf32, #tpu.memory_space<vmem>>, %arg2: memref<8x8xbf16, #tpu.memory_space<vmem>>, %arg3: memref<1x8xf32, #tpu.memory_space<vmem>>, %arg4: memref<16x8xbf16, #tpu.memory_space<vmem>>, %arg5: memref<1x8xf32, #tpu.memory_space<vmem>>, %arg6: memref<4x8xbf16, #tpu.memory_space<vmem>>, %arg7: memref<1x8xf32, #tpu.memory_space<vmem>>, %arg8: memref<16x16xbf16, #tpu.memory_space<vmem>>, %arg9: memref<1x16xf32, #tpu.memory_space<vmem>>, %arg10: memref<32x16xbf16, #tpu.memory_space<vmem>>, %arg11: memref<1x16xf32, #tpu.memory_space<vmem>>, %arg12: memref<8x16xbf16, #tpu.memory_space<vmem>>, %arg13: memref<1x16xf32, #tpu.memory_space<vmem>>, %arg14: memref<2x16x128xf32, #tpu.memory_space<vmem>>, %arg15: memref<2x18x16xf32, #tpu.memory_space<vmem>>, %arg16: memref<2x18x16xf32, #tpu.memory_space<vmem>>) attributes {dimension_semantics = [#tpu.dimension_semantics<parallel>], iteration_bounds = array<i64: 1>, scalar_prefetch = 0 : i64, scratch_operands = 2 : i64, tpu.core_type = #tpu.core_type<tc>, window_params = [{transform_indices = @transform_0, window_bounds = array<i64: 2, 16, 4>}, {pipeline_mode = #tpu.pipeline_mode<synchronous>, transform_indices = @transform_1, window_bounds = array<i64: 8, 8>}, {pipeline_mode = #tpu.pipeline_mode<synchronous>, transform_indices = @transform_2, window_bounds = array<i64: 1, 8>}, {pipeline_mode = #tpu.pipeline_mode<synchronous>, transform_indices = @transform_3, window_bounds = array<i64: 16, 8>}, {pipeline_mode = #tpu.pipeline_mode<synchronous>, transform_indices = @transform_4, window_bounds = array<i64: 1, 8>}, {pipeline_mode = #tpu.pipeline_mode<synchronous>, transform_indices = @transform_5, window_bounds = array<i64: 4, 8>}, {pipeline_mode = #tpu.pipeline_mode<synchronous>, transform_indices = @transform_6, window_bounds = array<i64: 1, 8>}, {pipeline_mode = #tpu.pipeline_mode<synchronous>, transform_indices = @transform_7, window_bounds = array<i64: 16, 16>}, {pipeline_mode = #tpu.pipeline_mode<synchronous>, transform_indices = @transform_8, window_bounds = array<i64: 1, 16>}, {pipeline_mode = #tpu.pipeline_mode<synchronous>, transform_indices = @transform_9, window_bounds = array<i64: 32, 16>}, {pipeline_mode = #tpu.pipeline_mode<synchronous>, transform_indices = @transform_10, window_bounds = array<i64: 1, 16>}, {pipeline_mode = #tpu.pipeline_mode<synchronous>, transform_indices = @transform_11, window_bounds = array<i64: 8, 16>}, {pipeline_mode = #tpu.pipeline_mode<synchronous>, transform_indices = @transform_12, window_bounds = array<i64: 1, 16>}, {transform_indices = @transform_13, window_bounds = array<i64: 2, 16, 128>}]} {
    %cst = arith.constant 0.000000e+00 : f32
    %0 = vector.broadcast %cst : f32 to vector<2x2x16xf32>
    %c0 = arith.constant 0 : index
    %c0_0 = arith.constant 0 : index
    %c0_1 = arith.constant 0 : index
    %1 = vector.load %arg15[%c0, %c0_0, %c0_1] : memref<2x18x16xf32, #tpu.memory_space<vmem>>, vector<2x2x16xf32>
    tpu.vector_store %arg15[%c0, %c0_0, %c0_1], %0 {strides = array<i32>} : memref<2x18x16xf32, #tpu.memory_space<vmem>>, vector<2x2x16xf32>,
    %c0_2 = arith.constant 0 : index
    %c0_3 = arith.constant 0 : index
    %c0_4 = arith.constant 0 : index
    %2 = vector.load %arg16[%c0_2, %c0_3, %c0_4] : memref<2x18x16xf32, #tpu.memory_space<vmem>>, vector<2x2x16xf32>
    tpu.vector_store %arg16[%c0_2, %c0_3, %c0_4], %0 {strides = array<i32>} : memref<2x18x16xf32, #tpu.memory_space<vmem>>, vector<2x2x16xf32>,
    %c0_5 = arith.constant 0 : index
    %c0_6 = arith.constant 0 : index
    %c0_7 = arith.constant 0 : index
    %3 = vector.load %arg1[%c0_5, %c0_6, %c0_7] : memref<2x16x4xf32, #tpu.memory_space<vmem>>, vector<2x16x4xf32>
    %c0_8 = arith.constant 0 : index
    %c2 = arith.constant 2 : index
    %c0_9 = arith.constant 0 : index
    %4 = vector.load %arg15[%c0_8, %c2, %c0_9] : memref<2x18x16xf32, #tpu.memory_space<vmem>>, vector<2x16x4xf32>
    tpu.vector_store %arg15[%c0_8, %c2, %c0_9], %3 {strides = array<i32>} : memref<2x18x16xf32, #tpu.memory_space<vmem>>, vector<2x16x4xf32>,
    %c0_10 = arith.constant 0 : index
    %c0_11 = arith.constant 0 : index
    %5 = vector.load %arg2[%c0_10, %c0_11] : memref<8x8xbf16, #tpu.memory_space<vmem>>, vector<8x8xbf16>
    %c0_12 = arith.constant 0 : index
    %c1 = arith.constant 1 : index
    %c0_13 = arith.constant 0 : index
    %6 = vector.load %arg15[%c0_12, %c1, %c0_13] : memref<2x18x16xf32, #tpu.memory_space<vmem>>, vector<2x16x4xf32>
    %7 = vector.shape_cast %6 : vector<2x16x4xf32> to vector<32x4xf32>
    %8 = arith.truncf %7 : vector<32x4xf32> to vector<32x4xbf16>
    %c0_14 = arith.constant 0 : index
    %c2_15 = arith.constant 2 : index
    %c0_16 = arith.constant 0 : index
    %9 = vector.load %arg15[%c0_14, %c2_15, %c0_16] : memref<2x18x16xf32, #tpu.memory_space<vmem>>, vector<2x16x4xf32>
    %10 = vector.shape_cast %9 : vector<2x16x4xf32> to vector<32x4xf32>
    %11 = arith.truncf %10 : vector<32x4xf32> to vector<32x4xbf16>
    %12 = tpu.concatenate %8, %11 in 1 : vector<32x4xbf16>, vector<32x4xbf16> -> vector<32x8xbf16>
    %cst_17 = arith.constant dense<0.000000e+00> : vector<32x8xf32>
    %13 = tpu.matmul %12, %5, %cst_17 {dimension_numbers = #tpu.dot_dimension_numbers<[1], [0], [0], [1], [0, 0, 1, 1], [], []>} : vector<32x8xbf16>, vector<8x8xbf16>, vector<32x8xf32> -> vector<32x8xf32>
    %c0_18 = arith.constant 0 : index
    %c0_19 = arith.constant 0 : index
    %14 = vector.load %arg3[%c0_18, %c0_19] : memref<1x8xf32, #tpu.memory_space<vmem>>, vector<1x8xf32>
    %15 = vector.broadcast %14 : vector<1x8xf32> to vector<32x8xf32>
    %16 = arith.addf %13, %15 : vector<32x8xf32>
    %cst_20 = arith.constant 0.000000e+00 : f32
    %17 = vector.broadcast %cst_20 : f32 to vector<32x8xf32>
    %18 = arith.maximumf %16, %17 : vector<32x8xf32>
    %19 = vector.shape_cast %18 : vector<32x8xf32> to vector<2x16x8xf32>
    %c0_21 = arith.constant 0 : index
    %c2_22 = arith.constant 2 : index
    %c0_23 = arith.constant 0 : index
    %20 = vector.load %arg16[%c0_21, %c2_22, %c0_23] : memref<2x18x16xf32, #tpu.memory_space<vmem>>, vector<2x16x8xf32>
    tpu.vector_store %arg16[%c0_21, %c2_22, %c0_23], %19 {strides = array<i32>} : memref<2x18x16xf32, #tpu.memory_space<vmem>>, vector<2x16x8xf32>,
    %c0_24 = arith.constant 0 : index
    %c0_25 = arith.constant 0 : index
    %21 = vector.load %arg4[%c0_24, %c0_25] : memref<16x8xbf16, #tpu.memory_space<vmem>>, vector<16x8xbf16>
    %c0_26 = arith.constant 0 : index
    %c1_27 = arith.constant 1 : index
    %c0_28 = arith.constant 0 : index
    %22 = vector.load %arg16[%c0_26, %c1_27, %c0_28] : memref<2x18x16xf32, #tpu.memory_space<vmem>>, vector<2x16x8xf32>
    %23 = vector.shape_cast %22 : vector<2x16x8xf32> to vector<32x8xf32>
    %24 = arith.truncf %23 : vector<32x8xf32> to vector<32x8xbf16>
    %c0_29 = arith.constant 0 : index
    %c2_30 = arith.constant 2 : index
    %c0_31 = arith.constant 0 : index
    %25 = vector.load %arg16[%c0_29, %c2_30, %c0_31] : memref<2x18x16xf32, #tpu.memory_space<vmem>>, vector<2x16x8xf32>
    %26 = vector.shape_cast %25 : vector<2x16x8xf32> to vector<32x8xf32>
    %27 = arith.truncf %26 : vector<32x8xf32> to vector<32x8xbf16>
    %28 = tpu.concatenate %24, %27 in 1 : vector<32x8xbf16>, vector<32x8xbf16> -> vector<32x16xbf16>
    %cst_32 = arith.constant dense<0.000000e+00> : vector<32x8xf32>
    %29 = tpu.matmul %28, %21, %cst_32 {dimension_numbers = #tpu.dot_dimension_numbers<[1], [0], [0], [1], [0, 0, 1, 1], [], []>} : vector<32x16xbf16>, vector<16x8xbf16>, vector<32x8xf32> -> vector<32x8xf32>
    %c0_33 = arith.constant 0 : index
    %c0_34 = arith.constant 0 : index
    %30 = vector.load %arg5[%c0_33, %c0_34] : memref<1x8xf32, #tpu.memory_space<vmem>>, vector<1x8xf32>
    %31 = vector.broadcast %30 : vector<1x8xf32> to vector<32x8xf32>
    %32 = arith.addf %29, %31 : vector<32x8xf32>
    %cst_35 = arith.constant 0.000000e+00 : f32
    %33 = vector.broadcast %cst_35 : f32 to vector<32x8xf32>
    %34 = arith.maximumf %32, %33 : vector<32x8xf32>
    %c0_36 = arith.constant 0 : index
    %c2_37 = arith.constant 2 : index
    %c0_38 = arith.constant 0 : index
    %35 = vector.load %arg15[%c0_36, %c2_37, %c0_38] : memref<2x18x16xf32, #tpu.memory_space<vmem>>, vector<2x16x4xf32>
    %36 = vector.shape_cast %35 : vector<2x16x4xf32> to vector<32x4xf32>
    %37 = arith.truncf %36 : vector<32x4xf32> to vector<32x4xbf16>
    %c0_39 = arith.constant 0 : index
    %c0_40 = arith.constant 0 : index
    %38 = vector.load %arg6[%c0_39, %c0_40] : memref<4x8xbf16, #tpu.memory_space<vmem>>, vector<4x8xbf16>
    %cst_41 = arith.constant dense<0.000000e+00> : vector<32x8xf32>
    %39 = tpu.matmul %37, %38, %cst_41 {dimension_numbers = #tpu.dot_dimension_numbers<[1], [0], [0], [1], [0, 0, 1, 1], [], []>} : vector<32x4xbf16>, vector<4x8xbf16>, vector<32x8xf32> -> vector<32x8xf32>
    %c0_42 = arith.constant 0 : index
    %c0_43 = arith.constant 0 : index
    %40 = vector.load %arg7[%c0_42, %c0_43] : memref<1x8xf32, #tpu.memory_space<vmem>>, vector<1x8xf32>
    %41 = vector.broadcast %40 : vector<1x8xf32> to vector<32x8xf32>
    %42 = arith.addf %39, %41 : vector<32x8xf32>
    %43 = arith.addf %34, %42 : vector<32x8xf32>
    %cst_44 = arith.constant 0.000000e+00 : f32
    %44 = vector.broadcast %cst_44 : f32 to vector<32x8xf32>
    %45 = arith.maximumf %43, %44 : vector<32x8xf32>
    %46 = vector.shape_cast %45 : vector<32x8xf32> to vector<2x16x8xf32>
    %c0_45 = arith.constant 0 : index
    %c2_46 = arith.constant 2 : index
    %c0_47 = arith.constant 0 : index
    %47 = vector.load %arg15[%c0_45, %c2_46, %c0_47] : memref<2x18x16xf32, #tpu.memory_space<vmem>>, vector<2x16x8xf32>
    tpu.vector_store %arg15[%c0_45, %c2_46, %c0_47], %46 {strides = array<i32>} : memref<2x18x16xf32, #tpu.memory_space<vmem>>, vector<2x16x8xf32>,
    %c0_48 = arith.constant 0 : index
    %c0_49 = arith.constant 0 : index
    %48 = vector.load %arg8[%c0_48, %c0_49] : memref<16x16xbf16, #tpu.memory_space<vmem>>, vector<16x16xbf16>
    %c0_50 = arith.constant 0 : index
    %c0_51 = arith.constant 0 : index
    %c0_52 = arith.constant 0 : index
    %49 = vector.load %arg15[%c0_50, %c0_51, %c0_52] : memref<2x18x16xf32, #tpu.memory_space<vmem>>, vector<2x16x8xf32>
    %50 = vector.shape_cast %49 : vector<2x16x8xf32> to vector<32x8xf32>
    %51 = arith.truncf %50 : vector<32x8xf32> to vector<32x8xbf16>
    %c0_53 = arith.constant 0 : index
    %c2_54 = arith.constant 2 : index
    %c0_55 = arith.constant 0 : index
    %52 = vector.load %arg15[%c0_53, %c2_54, %c0_55] : memref<2x18x16xf32, #tpu.memory_space<vmem>>, vector<2x16x8xf32>
    %53 = vector.shape_cast %52 : vector<2x16x8xf32> to vector<32x8xf32>
    %54 = arith.truncf %53 : vector<32x8xf32> to vector<32x8xbf16>
    %55 = tpu.concatenate %51, %54 in 1 : vector<32x8xbf16>, vector<32x8xbf16> -> vector<32x16xbf16>
    %cst_56 = arith.constant dense<0.000000e+00> : vector<32x16xf32>
    %56 = tpu.matmul %55, %48, %cst_56 {dimension_numbers = #tpu.dot_dimension_numbers<[1], [0], [0], [1], [0, 0, 1, 1], [], []>} : vector<32x16xbf16>, vector<16x16xbf16>, vector<32x16xf32> -> vector<32x16xf32>
    %c0_57 = arith.constant 0 : index
    %c0_58 = arith.constant 0 : index
    %57 = vector.load %arg9[%c0_57, %c0_58] : memref<1x16xf32, #tpu.memory_space<vmem>>, vector<1x16xf32>
    %58 = vector.broadcast %57 : vector<1x16xf32> to vector<32x16xf32>
    %59 = arith.addf %56, %58 : vector<32x16xf32>
    %cst_59 = arith.constant 0.000000e+00 : f32
    %60 = vector.broadcast %cst_59 : f32 to vector<32x16xf32>
    %61 = arith.maximumf %59, %60 : vector<32x16xf32>
    %62 = vector.shape_cast %61 : vector<32x16xf32> to vector<2x16x16xf32>
    %c0_60 = arith.constant 0 : index
    %c2_61 = arith.constant 2 : index
    %c0_62 = arith.constant 0 : index
    %63 = vector.load %arg16[%c0_60, %c2_61, %c0_62] : memref<2x18x16xf32, #tpu.memory_space<vmem>>, vector<2x16x16xf32>
    tpu.vector_store %arg16[%c0_60, %c2_61, %c0_62], %62 {strides = array<i32>} : memref<2x18x16xf32, #tpu.memory_space<vmem>>, vector<2x16x16xf32>,
    %c0_63 = arith.constant 0 : index
    %c0_64 = arith.constant 0 : index
    %64 = vector.load %arg10[%c0_63, %c0_64] : memref<32x16xbf16, #tpu.memory_space<vmem>>, vector<32x16xbf16>
    %c0_65 = arith.constant 0 : index
    %c0_66 = arith.constant 0 : index
    %c0_67 = arith.constant 0 : index
    %65 = vector.load %arg16[%c0_65, %c0_66, %c0_67] : memref<2x18x16xf32, #tpu.memory_space<vmem>>, vector<2x16x16xf32>
    %66 = vector.shape_cast %65 : vector<2x16x16xf32> to vector<32x16xf32>
    %67 = arith.truncf %66 : vector<32x16xf32> to vector<32x16xbf16>
    %c0_68 = arith.constant 0 : index
    %c2_69 = arith.constant 2 : index
    %c0_70 = arith.constant 0 : index
    %68 = vector.load %arg16[%c0_68, %c2_69, %c0_70] : memref<2x18x16xf32, #tpu.memory_space<vmem>>, vector<2x16x16xf32>
    %69 = vector.shape_cast %68 : vector<2x16x16xf32> to vector<32x16xf32>
    %70 = arith.truncf %69 : vector<32x16xf32> to vector<32x16xbf16>
    %71 = tpu.concatenate %67, %70 in 1 : vector<32x16xbf16>, vector<32x16xbf16> -> vector<32x32xbf16>
    %cst_71 = arith.constant dense<0.000000e+00> : vector<32x16xf32>
    %72 = tpu.matmul %71, %64, %cst_71 {dimension_numbers = #tpu.dot_dimension_numbers<[1], [0], [0], [1], [0, 0, 1, 1], [], []>} : vector<32x32xbf16>, vector<32x16xbf16>, vector<32x16xf32> -> vector<32x16xf32>
    %c0_72 = arith.constant 0 : index
    %c0_73 = arith.constant 0 : index
    %73 = vector.load %arg11[%c0_72, %c0_73] : memref<1x16xf32, #tpu.memory_space<vmem>>, vector<1x16xf32>
    %74 = vector.broadcast %73 : vector<1x16xf32> to vector<32x16xf32>
    %75 = arith.addf %72, %74 : vector<32x16xf32>
    %cst_74 = arith.constant 0.000000e+00 : f32
    %76 = vector.broadcast %cst_74 : f32 to vector<32x16xf32>
    %77 = arith.maximumf %75, %76 : vector<32x16xf32>
    %c0_75 = arith.constant 0 : index
    %c2_76 = arith.constant 2 : index
    %c0_77 = arith.constant 0 : index
    %78 = vector.load %arg15[%c0_75, %c2_76, %c0_77] : memref<2x18x16xf32, #tpu.memory_space<vmem>>, vector<2x16x8xf32>
    %79 = vector.shape_cast %78 : vector<2x16x8xf32> to vector<32x8xf32>
    %80 = arith.truncf %79 : vector<32x8xf32> to vector<32x8xbf16>
    %c0_78 = arith.constant 0 : index
    %c0_79 = arith.constant 0 : index
    %81 = vector.load %arg12[%c0_78, %c0_79] : memref<8x16xbf16, #tpu.memory_space<vmem>>, vector<8x16xbf16>
    %cst_80 = arith.constant dense<0.000000e+00> : vector<32x16xf32>
    %82 = tpu.matmul %80, %81, %cst_80 {dimension_numbers = #tpu.dot_dimension_numbers<[1], [0], [0], [1], [0, 0, 1, 1], [], []>} : vector<32x8xbf16>, vector<8x16xbf16>, vector<32x16xf32> -> vector<32x16xf32>
    %c0_81 = arith.constant 0 : index
    %c0_82 = arith.constant 0 : index
    %83 = vector.load %arg13[%c0_81, %c0_82] : memref<1x16xf32, #tpu.memory_space<vmem>>, vector<1x16xf32>
    %84 = vector.broadcast %83 : vector<1x16xf32> to vector<32x16xf32>
    %85 = arith.addf %82, %84 : vector<32x16xf32>
    %86 = arith.addf %77, %85 : vector<32x16xf32>
    %cst_83 = arith.constant 0.000000e+00 : f32
    %87 = vector.broadcast %cst_83 : f32 to vector<32x16xf32>
    %88 = arith.maximumf %86, %87 : vector<32x16xf32>
    %cst_84 = arith.constant 0.000000e+00 : f32
    %89 = vector.broadcast %cst_84 : f32 to vector<32x112xf32>
    %90 = tpu.concatenate %88, %89 in 1 : vector<32x16xf32>, vector<32x112xf32> -> vector<32x128xf32>
    %91 = vector.shape_cast %90 : vector<32x128xf32> to vector<2x16x128xf32>
    %c0_85 = arith.constant 0 : index
    %c0_86 = arith.constant 0 : index
    %c0_87 = arith.constant 0 : index
    %92 = vector.load %arg14[%c0_85, %c0_86, %c0_87] : memref<2x16x128xf32, #tpu.memory_space<vmem>>, vector<2x16x128xf32>
    tpu.vector_store %arg14[%c0_85, %c0_86, %c0_87], %91 {strides = array<i32>} : memref<2x16x128xf32, #tpu.memory_space<vmem>>, vector<2x16x128xf32>,
    return
  }
  func.func @transform_0(%arg0: i32) -> (i32, i32, i32) {
    %c0_i32 = arith.constant 0 : i32
    %c0_i32_0 = arith.constant 0 : i32
    %c0_i32_1 = arith.constant 0 : i32
    return %arg0, %c0_i32, %c0_i32_0 : i32, i32, i32
  }
  func.func @transform_1(%arg0: i32) -> (i32, i32) {
    %c0_i32 = arith.constant 0 : i32
    %c0_i32_0 = arith.constant 0 : i32
    %c0_i32_1 = arith.constant 0 : i32
    return %c0_i32, %c0_i32_0 : i32, i32
  }
  func.func @transform_2(%arg0: i32) -> (i32, i32) {
    %c0_i32 = arith.constant 0 : i32
    %c0_i32_0 = arith.constant 0 : i32
    %c0_i32_1 = arith.constant 0 : i32
    return %c0_i32, %c0_i32_0 : i32, i32
  }
  func.func @transform_3(%arg0: i32) -> (i32, i32) {
    %c0_i32 = arith.constant 0 : i32
    %c0_i32_0 = arith.constant 0 : i32
    %c0_i32_1 = arith.constant 0 : i32
    return %c0_i32, %c0_i32_0 : i32, i32
  }
  func.func @transform_4(%arg0: i32) -> (i32, i32) {
    %c0_i32 = arith.constant 0 : i32
    %c0_i32_0 = arith.constant 0 : i32
    %c0_i32_1 = arith.constant 0 : i32
    return %c0_i32, %c0_i32_0 : i32, i32
  }
  func.func @transform_5(%arg0: i32) -> (i32, i32) {
    %c0_i32 = arith.constant 0 : i32
    %c0_i32_0 = arith.constant 0 : i32
    %c0_i32_1 = arith.constant 0 : i32
    return %c0_i32, %c0_i32_0 : i32, i32
  }
  func.func @transform_6(%arg0: i32) -> (i32, i32) {
    %c0_i32 = arith.constant 0 : i32
    %c0_i32_0 = arith.constant 0 : i32
    %c0_i32_1 = arith.constant 0 : i32
    return %c0_i32, %c0_i32_0 : i32, i32
  }
  func.func @transform_7(%arg0: i32) -> (i32, i32) {
    %c0_i32 = arith.constant 0 : i32
    %c0_i32_0 = arith.constant 0 : i32
    %c0_i32_1 = arith.constant 0 : i32
    return %c0_i32, %c0_i32_0 : i32, i32
  }
  func.func @transform_8(%arg0: i32) -> (i32, i32) {
    %c0_i32 = arith.constant 0 : i32
    %c0_i32_0 = arith.constant 0 : i32
    %c0_i32_1 = arith.constant 0 : i32
    return %c0_i32, %c0_i32_0 : i32, i32
  }
  func.func @transform_9(%arg0: i32) -> (i32, i32) {
    %c0_i32 = arith.constant 0 : i32
    %c0_i32_0 = arith.constant 0 : i32
    %c0_i32_1 = arith.constant 0 : i32
    return %c0_i32, %c0_i32_0 : i32, i32
  }
  func.func @transform_10(%arg0: i32) -> (i32, i32) {
    %c0_i32 = arith.constant 0 : i32
    %c0_i32_0 = arith.constant 0 : i32
    %c0_i32_1 = arith.constant 0 : i32
    return %c0_i32, %c0_i32_0 : i32, i32
  }
  func.func @transform_11(%arg0: i32) -> (i32, i32) {
    %c0_i32 = arith.constant 0 : i32
    %c0_i32_0 = arith.constant 0 : i32
    %c0_i32_1 = arith.constant 0 : i32
    return %c0_i32, %c0_i32_0 : i32, i32
  }
  func.func @transform_12(%arg0: i32) -> (i32, i32) {
    %c0_i32 = arith.constant 0 : i32
    %c0_i32_0 = arith.constant 0 : i32
    %c0_i32_1 = arith.constant 0 : i32
    return %c0_i32, %c0_i32_0 : i32, i32
  }
  func.func @transform_13(%arg0: i32) -> (i32, i32, i32) {
    %c0_i32 = arith.constant 0 : i32
    %c0_i32_0 = arith.constant 0 : i32
    %c0_i32_1 = arith.constant 0 : i32
    return %arg0, %c0_i32, %c0_i32_0 : i32, i32, i32
  }
}

</mosaic_0001>

<llo_original>
// kernel: tpu_custom_call.1
$region0: #{tpu_custom_call.1}
  #allocation0 [shape = 'u32[]', space=smem, size = 0x4, offset = 0x4, fixed_abs, tag = 'smem constant byte address 0x4 - core index']
  #allocation1 [shape = 'u32[144,128]{1,0:T(1,128)}', space=vmem, size = 0x12000, scoped, tag = 'internal scratch']
  #allocation2 [shape = 'f32[2,18,16]{2,1,0:T(8,128)}', space=vmem, size = 0x6000, scoped, tag = 'scratch operand']
  #allocation3 [shape = 'f32[2,18,16]{2,1,0:T(8,128)}', space=vmem, size = 0x6000, scoped, tag = 'scratch operand']
  %s0 = inlined_call_operand.vmem [shape: f32[2,16,4], index: 0, kind: input, shape index: {}]
  %s1 = inlined_call_operand.vmem [shape: bf16[8,8], index: 1, kind: input, shape index: {}]
  %s2 = inlined_call_operand.vmem [shape: f32[1,8], index: 2, kind: input, shape index: {}]
  %s3 = inlined_call_operand.vmem [shape: bf16[16,8], index: 3, kind: input, shape index: {}]
  %s4 = inlined_call_operand.vmem [shape: f32[1,8], index: 4, kind: input, shape index: {}]
  %s5 = inlined_call_operand.vmem [shape: bf16[4,8], index: 5, kind: input, shape index: {}]
  %s6 = inlined_call_operand.vmem [shape: f32[1,8], index: 6, kind: input, shape index: {}]
  %s7 = inlined_call_operand.vmem [shape: bf16[16,16], index: 7, kind: input, shape index: {}]
  %s8 = inlined_call_operand.vmem [shape: f32[1,16], index: 8, kind: input, shape index: {}]
  %s9 = inlined_call_operand.vmem [shape: bf16[32,16], index: 9, kind: input, shape index: {}]
  %s10 = inlined_call_operand.vmem [shape: f32[1,16], index: 10, kind: input, shape index: {}]
  %s11 = inlined_call_operand.vmem [shape: bf16[8,16], index: 11, kind: input, shape index: {}]
  %s12 = inlined_call_operand.vmem [shape: f32[1,16], index: 12, kind: input, shape index: {}]
  %s13 = inlined_call_operand.hbm [shape: f32[2,16,128], index: 13, kind: output, shape index: {}]
  %s14 = sld [smem:[#allocation0]]
  $region62: #{tpu_custom_call.1} parent=0
    _
  %s16 = ssub.s32 1, %s14
  %s17 = scalar_select 0, %s16, %s14
  $region1: #{tpu_custom_call.1} parent=0
    #allocation4 [shape = 'u8[16384]{0}', space=vmem, size = 0x4000, scoped, tag = 'output window, operand 0, single buffered']
    #allocation5 [shape = 's32[1]{0}', space=sflag, size = 0x4, scoped, tag = 'scoped memory for tpu_custom_call.1']
    %18 = vsyncpa [#allocation5], 0
    // Predicated region
    $region2: #{tpu_custom_call.1} parent=1 // pred_check
      _
    $region3: #{tpu_custom_call.1} parent=1 // pred_check_branch
      %20 = sbr.rel (0) target = $region5
    $region4: #{tpu_custom_call.1} parent=1 // pred_region
      _
    $region5: #{tpu_custom_call.1} parent=1 // pred_fallthru
      _
    // Predicated region
    $region6: #{tpu_custom_call.1} parent=1 // pred_check
      _
    $region7: #{tpu_custom_call.1} parent=1 // pred_check_branch
      %22 = sbr.rel (0) target = $region9
    $region8: #{tpu_custom_call.1} parent=1 // pred_region
      _
    $region9: #{tpu_custom_call.1} parent=1 // pred_fallthru
      _
    // Predicated region
    $region10: #{tpu_custom_call.1} parent=1 // pred_check
      _
    $region11: #{tpu_custom_call.1} parent=1 // pred_check_branch
      %24 = sbr.rel (0) target = $region13
    $region12: #{tpu_custom_call.1} parent=1 // pred_region
      _
    $region13: #{tpu_custom_call.1} parent=1 // pred_fallthru
      _
    // Predicated region
    $region14: #{tpu_custom_call.1} parent=1 // pred_check
      _
    $region15: #{tpu_custom_call.1} parent=1 // pred_check_branch
      %26 = sbr.rel (0) target = $region17
    $region16: #{tpu_custom_call.1} parent=1 // pred_region
      _
    $region17: #{tpu_custom_call.1} parent=1 // pred_fallthru
      _
    // Predicated region
    $region18: #{tpu_custom_call.1} parent=1 // pred_check
      _
    $region19: #{tpu_custom_call.1} parent=1 // pred_check_branch
      %28 = sbr.rel (0) target = $region21
    $region20: #{tpu_custom_call.1} parent=1 // pred_region
      _
    $region21: #{tpu_custom_call.1} parent=1 // pred_fallthru
      _
    // Predicated region
    $region22: #{tpu_custom_call.1} parent=1 // pred_check
      _
    $region23: #{tpu_custom_call.1} parent=1 // pred_check_branch
      %30 = sbr.rel (0) target = $region25
    $region24: #{tpu_custom_call.1} parent=1 // pred_region
      _
    $region25: #{tpu_custom_call.1} parent=1 // pred_fallthru
      _
    // Predicated region
    $region26: #{tpu_custom_call.1} parent=1 // pred_check
      _
    $region27: #{tpu_custom_call.1} parent=1 // pred_check_branch
      %32 = sbr.rel (0) target = $region29
    $region28: #{tpu_custom_call.1} parent=1 // pred_region
      _
    $region29: #{tpu_custom_call.1} parent=1 // pred_fallthru
      _
    // Predicated region
    $region30: #{tpu_custom_call.1} parent=1 // pred_check
      _
    $region31: #{tpu_custom_call.1} parent=1 // pred_check_branch
      %34 = sbr.rel (0) target = $region33
    $region32: #{tpu_custom_call.1} parent=1 // pred_region
      _
    $region33: #{tpu_custom_call.1} parent=1 // pred_fallthru
      _
    // Predicated region
    $region34: #{tpu_custom_call.1} parent=1 // pred_check
      _
    $region35: #{tpu_custom_call.1} parent=1 // pred_check_branch
      %36 = sbr.rel (0) target = $region37
    $region36: #{tpu_custom_call.1} parent=1 // pred_region
      _
    $region37: #{tpu_custom_call.1} parent=1 // pred_fallthru
      _
    // Predicated region
    $region38: #{tpu_custom_call.1} parent=1 // pred_check
      _
    $region39: #{tpu_custom_call.1} parent=1 // pred_check_branch
      %38 = sbr.rel (0) target = $region41
    $region40: #{tpu_custom_call.1} parent=1 // pred_region
      _
    $region41: #{tpu_custom_call.1} parent=1 // pred_fallthru
      _
    // Predicated region
    $region42: #{tpu_custom_call.1} parent=1 // pred_check
      _
    $region43: #{tpu_custom_call.1} parent=1 // pred_check_branch
      %40 = sbr.rel (0) target = $region45
    $region44: #{tpu_custom_call.1} parent=1 // pred_region
      _
    $region45: #{tpu_custom_call.1} parent=1 // pred_fallthru
      _
    // Predicated region
    $region46: #{tpu_custom_call.1} parent=1 // pred_check
      _
    $region47: #{tpu_custom_call.1} parent=1 // pred_check_branch
      %42 = sbr.rel (0) target = $region49
    $region48: #{tpu_custom_call.1} parent=1 // pred_region
      _
    $region49: #{tpu_custom_call.1} parent=1 // pred_fallthru
      _
    // Predicated region
    $region50: #{tpu_custom_call.1} parent=1 // pred_check
      _
    $region51: #{tpu_custom_call.1} parent=1 // pred_check_branch
      %44 = sbr.rel (0) target = $region53
    $region52: #{tpu_custom_call.1} parent=1 // pred_region
      _
    $region53: #{tpu_custom_call.1} parent=1 // pred_fallthru
      _
    %vm46 = vcmask 123904
    %47 = vst.msk [vmem:[#allocation2] sm:$0x3] %vm46, 0.0
    %48 = vst.msk [vmem:[#allocation2 + $0x18] sm:$0x3] %vm46, 0.0
    %49 = vst.msk [vmem:[#allocation3] sm:$0x3] %vm46, 0.0
    %50 = vst.msk [vmem:[#allocation3 + $0x18] sm:$0x3] %vm46, 0.0
    %v51 = vld [vmem:[%s0] sm:$0xff]
    %v52 = vld [vmem:[%s0 + $0x8] sm:$0xff]
    %v53 = vld [vmem:[%s0 + $0x10] sm:$0xff]
    %v54 = vld [vmem:[%s0 + $0x18] sm:$0xff]
    %vm55 = vcmask 31744
    %56 = vst.msk [vmem:[#allocation2 + $0x2] sm:$0xff] %vm55, %v51
    %57 = vst.msk [vmem:[#allocation2 + $0xa] sm:$0xff] %vm55, %v52
    %58 = vst.msk [vmem:[#allocation2 + $0x1a] sm:$0xff] %vm55, %v53
    %59 = vst.msk [vmem:[#allocation2 + $0x22] sm:$0xff] %vm55, %v54
    %v60 = vld [vmem:[%s1] sm:$0xf]
    %v61 = vld [vmem:[#allocation2 + $0x1] sm:$0xff]
    %v62 = vld [vmem:[#allocation2 + $0x9] sm:$0xff]
    %v63 = vld [vmem:[#allocation2 + $0x19] sm:$0xff]
    %v64 = vld [vmem:[#allocation2 + $0x21] sm:$0xff]
    %v65 = vpack.c.bf16 %v62, %v61
    %v66 = vpack.c.bf16 %v64, %v63
    %v67 = vld [vmem:[#allocation2 + $0x2] sm:$0xff]
    %v68 = vld [vmem:[#allocation2 + $0xa] sm:$0xff]
    %v69 = vld [vmem:[#allocation2 + $0x1a] sm:$0xff]
    %v70 = vld [vmem:[#allocation2 + $0x22] sm:$0xff]
    %v71 = vpack.c.bf16 %v68, %v67
    %v72 = vpack.c.bf16 %v70, %v69
    %75 = vrot.lane.b32.xlu0 %v71, 4
    %v76 = vpop.permute.xlu0 %75
    %77 = vrot.lane.b32.xlu0 %v72, 4
    %v78 = vpop.permute.xlu0 %77
    %v81 = vsel %vm55, %v65, %v76
    %v84 = vsel %vm55, %v66, %v78
    %v85 = vld [vmem:[%s2] sm:$0x1]
    %v87 = vlaneseq
    %v88 = vshrl.u32 %v87, 7
    %v89 = vsub.s32 0, %v88
    %v90 = vrot.slane %v85, %v89
    %vm92 = vcmask 64512
    %v93 = vsel %vm92, %v81, 0
    %v95 = vsel %vm92, %v84, 0
    %vm97 = vcmask 1043456
    %v99 = vsel %vm97, %v60, 0
    %101 = vmatprep.subr.bf16.mxu0 0
    %102 = vmatpush1.bf16.msra.mxu0 0
    %103 = vmatprep.subr.bf16.mxu0 0
    %104 = vmatpush1.bf16.msra.mxu0 0
    %105 = vmatprep.subr.bf16.mxu0 0
    %106 = vmatpush1.bf16.msra.mxu0 0
    %107 = vmatprep.subr.bf16.mxu0 0
    %108 = vmatpush1.bf16.msra.mxu0 0
    %109 = vmatprep.subr.bf16.mxu0 0
    %110 = vmatpush1.bf16.msra.mxu0 0
    %111 = vmatprep.subr.bf16.mxu0 0
    %112 = vmatpush1.bf16.msra.mxu0 0
    %113 = vmatprep.subr.bf16.mxu0 0
    %114 = vmatpush1.bf16.msra.mxu0 0
    %115 = vmatprep.subr.bf16.mxu0 0
    %116 = vmatpush1.bf16.msra.mxu0 %v99
    %117 = vmatprep.subr.bf16.mxu0 0
    %118 = vmatpush2.bf16.msra.mxu0 0
    %119 = vmatprep.subr.bf16.mxu0 0
    %120 = vmatpush2.bf16.msra.mxu0 0
    %121 = vmatprep.subr.bf16.mxu0 0
    %122 = vmatpush2.bf16.msra.mxu0 0
    %123 = vmatprep.subr.bf16.mxu0 0
    %124 = vmatpush2.bf16.msra.mxu0 0
    %125 = vmatprep.subr.bf16.mxu0 0
    %126 = vmatpush2.bf16.msra.mxu0 0
    %127 = vmatprep.subr.bf16.mxu0 0
    %128 = vmatpush2.bf16.msra.mxu0 0
    %129 = vmatprep.subr.bf16.mxu0 0
    %130 = vmatpush2.bf16.msra.mxu0 0
    %131 = vmatprep.subr.bf16.mxu0 0
    %132 = vmatpush2.bf16.msra.mxu0 0
    %133 = vmatprep.mubr.bf16.mxu0 0
    %134 = vmatmul.mubr.bf16.gmra.mxu0 %v93
    %v135 = vpop.f32.mrf.mxu0
    %v136 = vadd.f32 %v90, %v135
    %v137 = vpop.f32.mrf.mxu0
    %v138 = vpop.f32.mrf.mxu0
    %v139 = vadd.f32 %v90, %v138
    %v140 = vpop.f32.mrf.mxu0
    %141 = vmatprep.mubr.bf16.mxu0 0
    %142 = vmatmul.mubr.bf16.gmra.mxu0 %v95
    %v143 = vpop.f32.mrf.mxu0
    %v144 = vadd.f32 %v90, %v143
    %v145 = vpop.f32.mrf.mxu0
    %v146 = vpop.f32.mrf.mxu0
    %v147 = vadd.f32 %v90, %v146
    %v148 = vpop.f32.mrf.mxu0
    %149 = vdwg.mxu0
    %v150 = vmax.f32 %v136, 0.0
    %v151 = vmax.f32 %v139, 0.0
    %v152 = vmax.f32 %v144, 0.0
    %v153 = vmax.f32 %v147, 0.0
    %154 = vst.msk [vmem:[#allocation3 + $0x2] sm:$0xff] %vm92, %v150
    %155 = vst.msk [vmem:[#allocation3 + $0xa] sm:$0xff] %vm92, %v151
    %156 = vst.msk [vmem:[#allocation3 + $0x1a] sm:$0xff] %vm92, %v152
    %157 = vst.msk [vmem:[#allocation3 + $0x22] sm:$0xff] %vm92, %v153
    %v158 = vld [vmem:[%s3] sm:$0xf]
    %v159 = vld [vmem:[%s3 + $0x4] sm:$0xf]
    %v160 = vld [vmem:[#allocation3 + $0x1] sm:$0xff]
    %v161 = vld [vmem:[#allocation3 + $0x9] sm:$0xff]
    %v162 = vld [vmem:[#allocation3 + $0x19] sm:$0xff]
    %v163 = vld [vmem:[#allocation3 + $0x21] sm:$0xff]
    %v164 = vpack.c.bf16 %v161, %v160
    %v165 = vpack.c.bf16 %v163, %v162
    %v166 = vld [vmem:[#allocation3 + $0x2] sm:$0xff]
    %v167 = vld [vmem:[#allocation3 + $0xa] sm:$0xff]
    %v168 = vld [vmem:[#allocation3 + $0x1a] sm:$0xff]
    %v169 = vld [vmem:[#allocation3 + $0x22] sm:$0xff]
    %v170 = vpack.c.bf16 %v167, %v166
    %v171 = vpack.c.bf16 %v169, %v168
    %174 = vrot.lane.b32.xlu0 %v170, 8
    %v175 = vpop.permute.xlu0 %174
    %176 = vrot.lane.b32.xlu0 %v171, 8
    %v177 = vpop.permute.xlu0 %176
    %v180 = vsel %vm92, %v164, %v175
    %v183 = vsel %vm92, %v165, %v177
    %v184 = vld [vmem:[%s4] sm:$0x1]
    %v186 = vlaneseq
    %v187 = vshrl.u32 %v186, 7
    %v188 = vsub.s32 0, %v187
    %v189 = vrot.slane %v184, %v188
    %v193 = vunpack.c.l.b16 %v158
    %v194 = vunpack.c.l.b16 %v159
    %v195 = vpack.c.b16 %v194, %v193
    %vm197 = vcmask 130048
    %v198 = vsel %vm197, %v180, 0
    %v200 = vsel %vm197, %v183, 0
    %202 = vmatprep.subr.bf16.mxu0 0
    %203 = vmatpush1.bf16.msra.mxu0 0
    %204 = vmatprep.subr.bf16.mxu0 0
    %205 = vmatpush1.bf16.msra.mxu0 0
    %206 = vmatprep.subr.bf16.mxu0 0
    %207 = vmatpush1.bf16.msra.mxu0 0
    %208 = vmatprep.subr.bf16.mxu0 0
    %209 = vmatpush1.bf16.msra.mxu0 0
    %210 = vmatprep.subr.bf16.mxu0 0
    %211 = vmatpush1.bf16.msra.mxu0 0
    %212 = vmatprep.subr.bf16.mxu0 0
    %213 = vmatpush1.bf16.msra.mxu0 0
    %214 = vmatprep.subr.bf16.mxu0 0
    %215 = vmatpush1.bf16.msra.mxu0 0
    %216 = vmatprep.subr.bf16.mxu0 0
    %217 = vmatpush1.bf16.msra.mxu0 %v195
    %218 = vmatprep.subr.bf16.mxu0 0
    %219 = vmatpush2.bf16.msra.mxu0 0
    %220 = vmatprep.subr.bf16.mxu0 0
    %221 = vmatpush2.bf16.msra.mxu0 0
    %222 = vmatprep.subr.bf16.mxu0 0
    %223 = vmatpush2.bf16.msra.mxu0 0
    %224 = vmatprep.subr.bf16.mxu0 0
    %225 = vmatpush2.bf16.msra.mxu0 0
    %226 = vmatprep.subr.bf16.mxu0 0
    %227 = vmatpush2.bf16.msra.mxu0 0
    %228 = vmatprep.subr.bf16.mxu0 0
    %229 = vmatpush2.bf16.msra.mxu0 0
    %230 = vmatprep.subr.bf16.mxu0 0
    %231 = vmatpush2.bf16.msra.mxu0 0
    %232 = vmatprep.subr.bf16.mxu0 0
    %233 = vmatpush2.bf16.msra.mxu0 0
    %234 = vmatprep.mubr.bf16.mxu0 0
    %235 = vmatmul.mubr.bf16.gmra.mxu0 %v198
    %v236 = vpop.f32.mrf.mxu0
    %v237 = vadd.f32 %v189, %v236
    %v238 = vpop.f32.mrf.mxu0
    %v239 = vpop.f32.mrf.mxu0
    %v240 = vadd.f32 %v189, %v239
    %v241 = vpop.f32.mrf.mxu0
    %242 = vmatprep.mubr.bf16.mxu0 0
    %243 = vmatmul.mubr.bf16.gmra.mxu0 %v200
    %v244 = vpop.f32.mrf.mxu0
    %v245 = vadd.f32 %v189, %v244
    %v246 = vpop.f32.mrf.mxu0
    %v247 = vpop.f32.mrf.mxu0
    %v248 = vadd.f32 %v189, %v247
    %v249 = vpop.f32.mrf.mxu0
    %250 = vdwg.mxu0
    %v251 = vmax.f32 %v237, 0.0
    %v252 = vmax.f32 %v240, 0.0
    %v253 = vmax.f32 %v245, 0.0
    %v254 = vmax.f32 %v248, 0.0
    %v255 = vld [vmem:[#allocation2 + $0x2] sm:$0xff]
    %v256 = vld [vmem:[#allocation2 + $0xa] sm:$0xff]
    %v257 = vld [vmem:[#allocation2 + $0x1a] sm:$0xff]
    %v258 = vld [vmem:[#allocation2 + $0x22] sm:$0xff]
    %v259 = vpack.c.bf16 %v256, %v255
    %v260 = vpack.c.bf16 %v258, %v257
    %v261 = vld [vmem:[%s5] sm:$0x3]
    %v262 = vld [vmem:[%s6] sm:$0x1]
    %v264 = vlaneseq
    %v265 = vshrl.u32 %v264, 7
    %v266 = vsub.s32 0, %v265
    %v267 = vrot.slane %v262, %v266
    %v270 = vsel %vm55, %v259, 0
    %v273 = vsel %vm55, %v260, 0
    %vm275 = vcmask 1041408
    %v277 = vsel %vm275, %v261, 0
    %279 = vmatprep.subr.bf16.mxu0 0
    %280 = vmatpush1.bf16.msra.mxu0 0
    %281 = vmatprep.subr.bf16.mxu0 0
    %282 = vmatpush1.bf16.msra.mxu0 0
    %283 = vmatprep.subr.bf16.mxu0 0
    %284 = vmatpush1.bf16.msra.mxu0 0
    %285 = vmatprep.subr.bf16.mxu0 0
    %286 = vmatpush1.bf16.msra.mxu0 0
    %287 = vmatprep.subr.bf16.mxu0 0
    %288 = vmatpush1.bf16.msra.mxu0 0
    %289 = vmatprep.subr.bf16.mxu0 0
    %290 = vmatpush1.bf16.msra.mxu0 0
    %291 = vmatprep.subr.bf16.mxu0 0
    %292 = vmatpush1.bf16.msra.mxu0 0
    %293 = vmatprep.subr.bf16.mxu0 0
    %294 = vmatpush1.bf16.msra.mxu0 %v277
    %295 = vmatprep.subr.bf16.mxu0 0
    %296 = vmatpush2.bf16.msra.mxu0 0
    %297 = vmatprep.subr.bf16.mxu0 0
    %298 = vmatpush2.bf16.msra.mxu0 0
    %299 = vmatprep.subr.bf16.mxu0 0
    %300 = vmatpush2.bf16.msra.mxu0 0
    %301 = vmatprep.subr.bf16.mxu0 0
    %302 = vmatpush2.bf16.msra.mxu0 0
    %303 = vmatprep.subr.bf16.mxu0 0
    %304 = vmatpush2.bf16.msra.mxu0 0
    %305 = vmatprep.subr.bf16.mxu0 0
    %306 = vmatpush2.bf16.msra.mxu0 0
    %307 = vmatprep.subr.bf16.mxu0 0
    %308 = vmatpush2.bf16.msra.mxu0 0
    %309 = vmatprep.subr.bf16.mxu0 0
    %310 = vmatpush2.bf16.msra.mxu0 0
    %311 = vmatprep.mubr.bf16.mxu0 0
    %312 = vmatmul.mubr.bf16.gmra.mxu0 %v270
    %v313 = vpop.f32.mrf.mxu0
    %v314 = vadd.f32 %v267, %v313
    %v315 = vpop.f32.mrf.mxu0
    %v316 = vpop.f32.mrf.mxu0
    %v317 = vadd.f32 %v267, %v316
    %v318 = vpop.f32.mrf.mxu0
    %319 = vmatprep.mubr.bf16.mxu0 0
    %320 = vmatmul.mubr.bf16.gmra.mxu0 %v273
    %v321 = vpop.f32.mrf.mxu0
    %v322 = vadd.f32 %v267, %v321
    %v323 = vpop.f32.mrf.mxu0
    %v324 = vpop.f32.mrf.mxu0
    %v325 = vadd.f32 %v267, %v324
    %v326 = vpop.f32.mrf.mxu0
    %327 = vdwg.mxu0
    %v328 = vadd.f32 %v251, %v314
    %v329 = vadd.f32 %v252, %v317
    %v330 = vadd.f32 %v253, %v322
    %v331 = vadd.f32 %v254, %v325
    %v332 = vmax.f32 %v328, 0.0
    %v333 = vmax.f32 %v329, 0.0
    %v334 = vmax.f32 %v330, 0.0
    %v335 = vmax.f32 %v331, 0.0
    %336 = vst.msk [vmem:[#allocation2 + $0x2] sm:$0xff] %vm92, %v332
    %337 = vst.msk [vmem:[#allocation2 + $0xa] sm:$0xff] %vm92, %v333
    %338 = vst.msk [vmem:[#allocation2 + $0x1a] sm:$0xff] %vm92, %v334
    %339 = vst.msk [vmem:[#allocation2 + $0x22] sm:$0xff] %vm92, %v335
    %v340 = vld [vmem:[%s7] sm:$0xf]
    %v341 = vld [vmem:[%s7 + $0x4] sm:$0xf]
    %v342 = vld [vmem:[#allocation2] sm:$0xff]
    %v343 = vld [vmem:[#allocation2 + $0x8] sm:$0xff]
    %v344 = vld [vmem:[#allocation2 + $0x18] sm:$0xff]
    %v345 = vld [vmem:[#allocation2 + $0x20] sm:$0xff]
    %v346 = vpack.c.bf16 %v343, %v342
    %v347 = vpack.c.bf16 %v345, %v344
    %v348 = vld [vmem:[#allocation2 + $0x2] sm:$0xff]
    %v349 = vld [vmem:[#allocation2 + $0xa] sm:$0xff]
    %v350 = vld [vmem:[#allocation2 + $0x1a] sm:$0xff]
    %v351 = vld [vmem:[#allocation2 + $0x22] sm:$0xff]
    %v352 = vpack.c.bf16 %v349, %v348
    %v353 = vpack.c.bf16 %v351, %v350
    %356 = vrot.lane.b32.xlu0 %v352, 8
    %v357 = vpop.permute.xlu0 %356
    %358 = vrot.lane.b32.xlu0 %v353, 8
    %v359 = vpop.permute.xlu0 %358
    %v362 = vsel %vm92, %v346, %v357
    %v365 = vsel %vm92, %v347, %v359
    %v366 = vld [vmem:[%s8] sm:$0x1]
    %v368 = vlaneseq
    %v369 = vshrl.u32 %v368, 7
    %v370 = vsub.s32 0, %v369
    %v371 = vrot.slane %v366, %v370
    %v375 = vunpack.c.l.b16 %v340
    %v376 = vunpack.c.l.b16 %v341
    %v377 = vpack.c.b16 %v376, %v375
    %v379 = vsel %vm197, %v362, 0
    %v381 = vsel %vm197, %v365, 0
    %383 = vmatprep.subr.bf16.mxu0 0
    %384 = vmatpush1.bf16.msra.mxu0 0
    %385 = vmatprep.subr.bf16.mxu0 0
    %386 = vmatpush1.bf16.msra.mxu0 0
    %387 = vmatprep.subr.bf16.mxu0 0
    %388 = vmatpush1.bf16.msra.mxu0 0
    %389 = vmatprep.subr.bf16.mxu0 0
    %390 = vmatpush1.bf16.msra.mxu0 0
    %391 = vmatprep.subr.bf16.mxu0 0
    %392 = vmatpush1.bf16.msra.mxu0 0
    %393 = vmatprep.subr.bf16.mxu0 0
    %394 = vmatpush1.bf16.msra.mxu0 0
    %395 = vmatprep.subr.bf16.mxu0 0
    %396 = vmatpush1.bf16.msra.mxu0 0
    %397 = vmatprep.subr.bf16.mxu0 0
    %398 = vmatpush1.bf16.msra.mxu0 %v377
    %399 = vmatprep.subr.bf16.mxu0 0
    %400 = vmatpush2.bf16.msra.mxu0 0
    %401 = vmatprep.subr.bf16.mxu0 0
    %402 = vmatpush2.bf16.msra.mxu0 0
    %403 = vmatprep.subr.bf16.mxu0 0
    %404 = vmatpush2.bf16.msra.mxu0 0
    %405 = vmatprep.subr.bf16.mxu0 0
    %406 = vmatpush2.bf16.msra.mxu0 0
    %407 = vmatprep.subr.bf16.mxu0 0
    %408 = vmatpush2.bf16.msra.mxu0 0
    %409 = vmatprep.subr.bf16.mxu0 0
    %410 = vmatpush2.bf16.msra.mxu0 0
    %411 = vmatprep.subr.bf16.mxu0 0
    %412 = vmatpush2.bf16.msra.mxu0 0
    %413 = vmatprep.subr.bf16.mxu0 0
    %414 = vmatpush2.bf16.msra.mxu0 0
    %415 = vmatprep.mubr.bf16.mxu0 0
    %416 = vmatmul.mubr.bf16.gmra.mxu0 %v379
    %v417 = vpop.f32.mrf.mxu0
    %v418 = vadd.f32 %v371, %v417
    %v419 = vpop.f32.mrf.mxu0
    %v420 = vpop.f32.mrf.mxu0
    %v421 = vadd.f32 %v371, %v420
    %v422 = vpop.f32.mrf.mxu0
    %423 = vmatprep.mubr.bf16.mxu0 0
    %424 = vmatmul.mubr.bf16.gmra.mxu0 %v381
    %v425 = vpop.f32.mrf.mxu0
    %v426 = vadd.f32 %v371, %v425
    %v427 = vpop.f32.mrf.mxu0
    %v428 = vpop.f32.mrf.mxu0
    %v429 = vadd.f32 %v371, %v428
    %v430 = vpop.f32.mrf.mxu0
    %431 = vdwg.mxu0
    %v432 = vmax.f32 %v418, 0.0
    %v433 = vmax.f32 %v421, 0.0
    %v434 = vmax.f32 %v426, 0.0
    %v435 = vmax.f32 %v429, 0.0
    %436 = vst.msk [vmem:[#allocation3 + $0x2] sm:$0xff] %vm197, %v432
    %437 = vst.msk [vmem:[#allocation3 + $0xa] sm:$0xff] %vm197, %v433
    %438 = vst.msk [vmem:[#allocation3 + $0x1a] sm:$0xff] %vm197, %v434
    %439 = vst.msk [vmem:[#allocation3 + $0x22] sm:$0xff] %vm197, %v435
    %v440 = vld [vmem:[%s9] sm:$0xf]
    %v441 = vld [vmem:[%s9 + $0x4] sm:$0xf]
    %v442 = vld [vmem:[%s9 + $0x8] sm:$0xf]
    %v443 = vld [vmem:[%s9 + $0xc] sm:$0xf]
    %v444 = vld [vmem:[#allocation3] sm:$0xff]
    %v445 = vld [vmem:[#allocation3 + $0x8] sm:$0xff]
    %v446 = vld [vmem:[#allocation3 + $0x18] sm:$0xff]
    %v447 = vld [vmem:[#allocation3 + $0x20] sm:$0xff]
    %v448 = vpack.c.bf16 %v445, %v444
    %v449 = vpack.c.bf16 %v447, %v446
    %v450 = vld [vmem:[#allocation3 + $0x2] sm:$0xff]
    %v451 = vld [vmem:[#allocation3 + $0xa] sm:$0xff]
    %v452 = vld [vmem:[#allocation3 + $0x1a] sm:$0xff]
    %v453 = vld [vmem:[#allocation3 + $0x22] sm:$0xff]
    %v454 = vpack.c.bf16 %v451, %v450
    %v455 = vpack.c.bf16 %v453, %v452
    %458 = vrot.lane.b32.xlu0 %v454, 16
    %v459 = vpop.permute.xlu0 %458
    %460 = vrot.lane.b32.xlu0 %v455, 16
    %v461 = vpop.permute.xlu0 %460
    %v464 = vsel %vm197, %v448, %v459
    %v467 = vsel %vm197, %v449, %v461
    %v468 = vld [vmem:[%s10] sm:$0x1]
    %v470 = vlaneseq
    %v471 = vshrl.u32 %v470, 7
    %v472 = vsub.s32 0, %v471
    %v473 = vrot.slane %v468, %v472
    %v479 = vunpack.c.l.b16 %v440
    %v480 = vunpack.c.l.b16 %v441
    %v481 = vunpack.c.l.b16 %v442
    %v482 = vunpack.c.l.b16 %v443
    %v483 = vpack.c.b16 %v480, %v479
    %v484 = vpack.c.b16 %v482, %v481
    %vm487 = vcmask 261120
    %v488 = vsel %vm487, %v464, 0
    %v490 = vsel %vm487, %v467, 0
    %492 = vmatprep.subr.bf16.mxu0 0
    %493 = vmatpush1.bf16.msra.mxu0 0
    %494 = vmatprep.subr.bf16.mxu0 0
    %495 = vmatpush1.bf16.msra.mxu0 0
    %496 = vmatprep.subr.bf16.mxu0 0
    %497 = vmatpush1.bf16.msra.mxu0 0
    %498 = vmatprep.subr.bf16.mxu0 0
    %499 = vmatpush1.bf16.msra.mxu0 0
    %500 = vmatprep.subr.bf16.mxu0 0
    %501 = vmatpush1.bf16.msra.mxu0 0
    %502 = vmatprep.subr.bf16.mxu0 0
    %503 = vmatpush1.bf16.msra.mxu0 0
    %504 = vmatprep.subr.bf16.mxu0 0
    %505 = vmatpush1.bf16.msra.mxu0 %v484
    %506 = vmatprep.subr.bf16.mxu0 0
    %507 = vmatpush1.bf16.msra.mxu0 %v483
    %508 = vmatprep.subr.bf16.mxu0 0
    %509 = vmatpush2.bf16.msra.mxu0 0
    %510 = vmatprep.subr.bf16.mxu0 0
    %511 = vmatpush2.bf16.msra.mxu0 0
    %512 = vmatprep.subr.bf16.mxu0 0
    %513 = vmatpush2.bf16.msra.mxu0 0
    %514 = vmatprep.subr.bf16.mxu0 0
    %515 = vmatpush2.bf16.msra.mxu0 0
    %516 = vmatprep.subr.bf16.mxu0 0
    %517 = vmatpush2.bf16.msra.mxu0 0
    %518 = vmatprep.subr.bf16.mxu0 0
    %519 = vmatpush2.bf16.msra.mxu0 0
    %520 = vmatprep.subr.bf16.mxu0 0
    %521 = vmatpush2.bf16.msra.mxu0 0
    %522 = vmatprep.subr.bf16.mxu0 0
    %523 = vmatpush2.bf16.msra.mxu0 0
    %524 = vmatprep.mubr.bf16.mxu0 0
    %525 = vmatmul.mubr.bf16.gmra.mxu0 %v488
    %v526 = vpop.f32.mrf.mxu0
    %v527 = vadd.f32 %v473, %v526
    %v528 = vpop.f32.mrf.mxu0
    %v529 = vpop.f32.mrf.mxu0
    %v530 = vadd.f32 %v473, %v529
    %v531 = vpop.f32.mrf.mxu0
    %532 = vmatprep.mubr.bf16.mxu0 0
    %533 = vmatmul.mubr.bf16.gmra.mxu0 %v490
    %v534 = vpop.f32.mrf.mxu0
    %v535 = vadd.f32 %v473, %v534
    %v536 = vpop.f32.mrf.mxu0
    %v537 = vpop.f32.mrf.mxu0
    %v538 = vadd.f32 %v473, %v537
    %v539 = vpop.f32.mrf.mxu0
    %540 = vdwg.mxu0
    %v541 = vmax.f32 %v527, 0.0
    %v542 = vmax.f32 %v530, 0.0
    %v543 = vmax.f32 %v535, 0.0
    %v544 = vmax.f32 %v538, 0.0
    %v545 = vld [vmem:[#allocation2 + $0x2] sm:$0xff]
    %v546 = vld [vmem:[#allocation2 + $0xa] sm:$0xff]
    %v547 = vld [vmem:[#allocation2 + $0x1a] sm:$0xff]
    %v548 = vld [vmem:[#allocation2 + $0x22] sm:$0xff]
    %v549 = vpack.c.bf16 %v546, %v545
    %v550 = vpack.c.bf16 %v548, %v547
    %v551 = vld [vmem:[%s11] sm:$0xf]
    %v552 = vld [vmem:[%s12] sm:$0x1]
    %v554 = vlaneseq
    %v555 = vshrl.u32 %v554, 7
    %v556 = vsub.s32 0, %v555
    %v557 = vrot.slane %v552, %v556
    %v560 = vsel %vm92, %v549, 0
    %v563 = vsel %vm92, %v550, 0
    %v566 = vsel %vm97, %v551, 0
    %568 = vmatprep.subr.bf16.mxu0 0
    %569 = vmatpush1.bf16.msra.mxu0 0
    %570 = vmatprep.subr.bf16.mxu0 0
    %571 = vmatpush1.bf16.msra.mxu0 0
    %572 = vmatprep.subr.bf16.mxu0 0
    %573 = vmatpush1.bf16.msra.mxu0 0
    %574 = vmatprep.subr.bf16.mxu0 0
    %575 = vmatpush1.bf16.msra.mxu0 0
    %576 = vmatprep.subr.bf16.mxu0 0
    %577 = vmatpush1.bf16.msra.mxu0 0
    %578 = vmatprep.subr.bf16.mxu0 0
    %579 = vmatpush1.bf16.msra.mxu0 0
    %580 = vmatprep.subr.bf16.mxu0 0
    %581 = vmatpush1.bf16.msra.mxu0 0
    %582 = vmatprep.subr.bf16.mxu0 0
    %583 = vmatpush1.bf16.msra.mxu0 %v566
    %584 = vmatprep.subr.bf16.mxu0 0
    %585 = vmatpush2.bf16.msra.mxu0 0
    %586 = vmatprep.subr.bf16.mxu0 0
    %587 = vmatpush2.bf16.msra.mxu0 0
    %588 = vmatprep.subr.bf16.mxu0 0
    %589 = vmatpush2.bf16.msra.mxu0 0
    %590 = vmatprep.subr.bf16.mxu0 0
    %591 = vmatpush2.bf16.msra.mxu0 0
    %592 = vmatprep.subr.bf16.mxu0 0
    %593 = vmatpush2.bf16.msra.mxu0 0
    %594 = vmatprep.subr.bf16.mxu0 0
    %595 = vmatpush2.bf16.msra.mxu0 0
    %596 = vmatprep.subr.bf16.mxu0 0
    %597 = vmatpush2.bf16.msra.mxu0 0
    %598 = vmatprep.subr.bf16.mxu0 0
    %599 = vmatpush2.bf16.msra.mxu0 0
    %600 = vmatprep.mubr.bf16.mxu0 0
    %601 = vmatmul.mubr.bf16.gmra.mxu0 %v560
    %v602 = vpop.f32.mrf.mxu0
    %v603 = vadd.f32 %v557, %v602
    %v604 = vpop.f32.mrf.mxu0
    %v605 = vpop.f32.mrf.mxu0
    %v606 = vadd.f32 %v557, %v605
    %v607 = vpop.f32.mrf.mxu0
    %608 = vmatprep.mubr.bf16.mxu0 0
    %609 = vmatmul.mubr.bf16.gmra.mxu0 %v563
    %v610 = vpop.f32.mrf.mxu0
    %v611 = vadd.f32 %v557, %v610
    %v612 = vpop.f32.mrf.mxu0
    %v613 = vpop.f32.mrf.mxu0
    %v614 = vadd.f32 %v557, %v613
    %v615 = vpop.f32.mrf.mxu0
    %616 = vdwg.mxu0
    %v617 = vadd.f32 %v541, %v603
    %v618 = vadd.f32 %v542, %v606
    %v619 = vadd.f32 %v543, %v611
    %v620 = vadd.f32 %v544, %v614
    %v621 = vmax.f32 %v617, 0.0
    %v622 = vmax.f32 %v618, 0.0
    %v623 = vmax.f32 %v619, 0.0
    %v624 = vmax.f32 %v620, 0.0
    %v625 = vsel %vm197, %v621, 0.0
    %v626 = vsel %vm197, %v622, 0.0
    %v627 = vsel %vm197, %v623, 0.0
    %v628 = vsel %vm197, %v624, 0.0
    %629 = vst [vmem:[#allocation4] sm:$0xff] %v625
    %630 = vst [vmem:[#allocation4 + $0x8] sm:$0xff] %v626
    %631 = vst [vmem:[#allocation4 + $0x10] sm:$0xff] %v627
    %632 = vst [vmem:[#allocation4 + $0x18] sm:$0xff] %v628
    // Predicated region
    $region54: #{tpu_custom_call.1} parent=1 // pred_check
      _
    $region55: #{tpu_custom_call.1} parent=1 // pred_check_branch
      %634 = sbr.rel (0) target = $region57
    $region56: #{tpu_custom_call.1} parent=1 // pred_region
      %s636 = ssub.s32 512, 512
      %637 = vsyncadd [#allocation5], %s636
      %s638 = sshll.u32 [#allocation4], 4
      %s639 = int_to_ptr.vmem [resolvable:$true] %s638
      %644 = dma.vmem_to_hbm [thread:$0]  %s639, 512, %s13, [#allocation5], 128, 128, 8
    $region57: #{tpu_custom_call.1} parent=1 // pred_fallthru
      _
    // Predicated region
    $region58: #{tpu_custom_call.1} parent=1 // pred_check
      _
    $region59: #{tpu_custom_call.1} parent=1 // pred_check_branch
      %646 = sbr.rel (0) target = $region61
    $region60: #{tpu_custom_call.1} parent=1 // pred_region
      %647 = dma.done [#allocation5], 512
    $region61: #{tpu_custom_call.1} parent=1 // pred_fallthru
      _
    %648 = vsyncpa [#allocation5], 1

</llo_original>
